<compile_context>
chip_gen: v7x
topology: tpu7x:2x2x1
jax: 0.10.0
libtpu: 0.0.40
codegen_flags: <defaults>
</compile_context>

<pallas_src>
import functools

import numpy as np
import jax
import jax.numpy as jnp
from jax.experimental import pallas as pl
from jax.experimental.pallas import tpu as pltpu

_LANES = 128
_SUBLANES = 8
_MAX_TILE_ROWS = 2048                 # 1 MiB per f32 input tile; 2 inputs x 2 bufs = 4 MiB
_NEG = -1e30                          # in-kernel f32 mask fill: exp(_NEG - m) == 0 exactly
_VMEM_LIMIT = 48 * 1024 * 1024


def _sublane_pack(dtype) -> int:
    # Sublane packing of the input dtype: 8 for f32, 16 for bf16/f16, 32 for 8-bit.
    return max(_SUBLANES, 32 // jnp.dtype(dtype).itemsize)


def _kl2_kernel(x_ref, t_ref, m_x_ref, l_x_ref, s_ref, m_t_ref, l_t_ref,
                *, n_valid, need_mask):
    """One (tile_r, 128) tile of one batch's flattened logits.

    x_ref, t_ref : VMEM (tile_r, 128) preds / target tile, input dtype.
    m_x_ref, l_x_ref, s_ref, m_t_ref, l_t_ref :
        VMEM (8, 128) f32 per-batch slot accumulators.  They are OUTPUT blocks
        whose index map is constant along the row-tile grid axis, so they stay
        resident in VMEM across that axis and are written back per batch.
    """
    ri = pl.program_id(1)

    @pl.when(ri == 0)
    def _init():
        neg = jnp.full((_SUBLANES, _LANES), _NEG, dtype=jnp.float32)
        zero = jnp.zeros((_SUBLANES, _LANES), dtype=jnp.float32)
        m_x_ref[...] = neg
        m_t_ref[...] = neg
        l_x_ref[...] = zero
        s_ref[...] = zero
        l_t_ref[...] = zero

    # Upcast on the VMEM tile (keeps HBM bytes at bf16 width for bf16 inputs;
    # v5e has no bf16 VPU/EUP so f32 math is required anyway).
    x = x_ref[...].astype(jnp.float32)
    t = t_ref[...].astype(jnp.float32)
    tile_r = x.shape[0]

    if need_mask:
        # Ragged last tile / lane pad: mask by flat element index, so the value
        # of any padding or over-read garbage never matters (no fp16 hazard).
        flat = (jax.lax.broadcasted_iota(jnp.int32, (tile_r, _LANES), 0) * _LANES
                + jax.lax.broadcasted_iota(jnp.int32, (tile_r, _LANES), 1))
        valid = flat + ri * (tile_r * _LANES) < n_valid
        x = jnp.where(valid, x, _NEG)
        t = jnp.where(valid, t, _NEG)

    g = tile_r // _SUBLANES
    xg = x.reshape(g, _SUBLANES, _LANES)   # layout-preserving unflatten
    tg = t.reshape(g, _SUBLANES, _LANES)

    # --- preds: online softmax stats (VPU max/add + EUP exp only) ------------
    m_old = m_x_ref[...]
    m_new = jnp.maximum(m_old, xg.max(axis=0))        # reduce over non-layout axis
    alpha = jnp.exp(m_old - m_new)                    # (8,128) rescale factor
    p = jnp.exp(xg - m_new[None, :, :])
    l_x_ref[...] = alpha * l_x_ref[...] + p.sum(axis=0)
    s_ref[...] = alpha * s_ref[...] + (p * (xg - tg)).sum(axis=0)
    m_x_ref[...] = m_new

    # --- target: only its logsumexp is needed ---------------------------------
    mt_old = m_t_ref[...]
    mt_new = jnp.maximum(mt_old, tg.max(axis=0))
    beta = jnp.exp(mt_old - mt_new)
    l_t_ref[...] = beta * l_t_ref[...] + jnp.exp(tg - mt_new[None, :, :]).sum(axis=0)
    m_t_ref[...] = mt_new


def _kl2_xla_fallback(x2, t2, b):
    """Tiny inputs only (< pack*128 elements per batch): plain XLA."""
    p = jax.nn.softmax(x2.astype(jnp.float32), axis=1)
    q = jax.nn.softmax(t2.astype(jnp.float32), axis=1)
    return jnp.sum(p * jnp.log(p / q)) / b


@jax.jit
def criterion_kl2(preds, target):
    """Pallas implementation of CriterionKL2.forward.  Returns a scalar f32."""
    assert preds.shape == target.shape, "preds and target must have the same shape"
    b = preds.shape[0]
    n = int(np.prod(preds.shape[1:]))

    x2 = preds.reshape(b, n)        # row-major flatten of (c, w, h): free
    t2 = target.reshape(b, n)

    pack = _sublane_pack(preds.dtype)
    rows = -(-n // _LANES)          # rows of the (b, rows, 128) lane-dense slab

    if rows < pack:
        # Too small for a useful kernel launch; keep semantics with plain XLA.
        return _kl2_xla_fallback(x2, t2, b)

    if n != rows * _LANES:
        # c*w*h not a multiple of 128: materialise a small lane pad so the
        # (b, rows, 128) view exists.  Pad VALUE is irrelevant (masked in-kernel).
        pad = rows * _LANES - n
        x2 = jnp.pad(x2, ((0, 0), (0, pad)))
        t2 = jnp.pad(t2, ((0, 0), (0, pad)))

    x3 = x2.reshape(b, rows, _LANES)
    t3 = t2.reshape(b, rows, _LANES)

    # tile_r: multiple of the dtype's sublane packing and <= rows (ragged last
    # tile handled by in-kernel masking, never by padding the HBM arrays).
    tile_r = min(_MAX_TILE_ROWS, (rows // pack) * pack)
    grid_r = -(-rows // tile_r)
    need_mask = (grid_r * tile_r * _LANES) != n

    kernel = functools.partial(_kl2_kernel, n_valid=n, need_mask=need_mask)
    stat = jax.ShapeDtypeStruct((b, _SUBLANES, _LANES), jnp.float32)
    stat_spec = pl.BlockSpec((None, _SUBLANES, _LANES), lambda bi, ri: (bi, 0, 0))

    m_x, l_x, s, m_t, l_t = pl.pallas_call(
        kernel,
        out_shape=(stat,) * 5,
        grid=(b, grid_r),
        in_specs=[
            pl.BlockSpec((None, tile_r, _LANES), lambda bi, ri: (bi, ri, 0)),  # preds
            pl.BlockSpec((None, tile_r, _LANES), lambda bi, ri: (bi, ri, 0)),  # target
        ],
        out_specs=(stat_spec,) * 5,
        compiler_params=pltpu.CompilerParams(
            # batch axis parallel (v7x megacore); row-tile axis carries the
            # per-batch accumulators -> arbitrary.
            dimension_semantics=("parallel", "arbitrary"),
            vmem_limit_bytes=_VMEM_LIMIT,
        ),
    )(x3, t3)

    # Collapse the (8,128) slot statistics to per-batch scalars (tiny; XLA).
    M_x = jnp.max(m_x, axis=(1, 2))
    w_x = jnp.exp(m_x - M_x[:, None, None])
    L_x = jnp.sum(l_x * w_x, axis=(1, 2))
    S = jnp.sum(s * w_x, axis=(1, 2))
    M_t = jnp.max(m_t, axis=(1, 2))
    L_t = jnp.sum(l_t * jnp.exp(m_t - M_t[:, None, None]), axis=(1, 2))

    lse_x = M_x + jnp.log(L_x)
    lse_t = M_t + jnp.log(L_t)
    kl_b = S / L_x - (lse_x - lse_t)     # = sum_i p_i * (log p_i - log q_i)
    return jnp.sum(kl_b) / b


def _reference(preds, target):
    """Pure-JAX reference mirroring the PyTorch module exactly."""
    b = preds.shape[0]
    p = jax.nn.softmax(preds.reshape(b, -1).astype(jnp.float32), axis=1)
    q = jax.nn.softmax(target.reshape(b, -1).astype(jnp.float32), axis=1)
    return jnp.sum(p * jnp.log(p / q)) / b


if __name__ == "__main__":
    key = jax.random.PRNGKey(0)
    k1, k2 = jax.random.split(key)

    # Small NCHW shapes consistent with the module: b=2, c=4, w=h=16.
    shape = (2, 4, 16, 16)
    preds = jax.random.normal(k1, shape, dtype=jnp.float32)
    target = jax.random.normal(k2, shape, dtype=jnp.float32)

    out = jax.block_until_ready(criterion_kl2(preds, target))
    ref = jax.block_until_ready(_reference(preds, target))

    np.testing.assert_allclose(np.asarray(out), np.asarray(ref), rtol=1e-5, atol=1e-5)
    print("KERNEL_OK")
</pallas_src>

<mosaic_0001>
module attributes {stable_mosaic.version = 11 : i64} {
  func.func @_kl2_kernel(%arg0: i32, %arg1: i32, %arg2: memref<1x8x128xf32, #tpu.memory_space<vmem>>, %arg3: memref<1x8x128xf32, #tpu.memory_space<vmem>>, %arg4: memref<1x8x128xf32, #tpu.memory_space<vmem>>, %arg5: memref<1x8x128xf32, #tpu.memory_space<vmem>>, %arg6: memref<1x8x128xf32, #tpu.memory_space<vmem>>, %arg7: memref<1x8x128xf32, #tpu.memory_space<vmem>>, %arg8: memref<1x8x128xf32, #tpu.memory_space<vmem>>) attributes {dimension_semantics = [#tpu.dimension_semantics<parallel>, #tpu.dimension_semantics<arbitrary>], iteration_bounds = array<i64: 2, 1>, scalar_prefetch = 0 : i64, scratch_operands = 0 : i64, tpu.core_type = #tpu.core_type<tc>, window_params = [{transform_indices = @transform_0, window_bounds = array<i64: 1, 8, 128>}, {transform_indices = @transform_1, window_bounds = array<i64: 1, 8, 128>}, {transform_indices = @transform_2, window_bounds = array<i64: 1, 8, 128>}, {transform_indices = @transform_3, window_bounds = array<i64: 1, 8, 128>}, {transform_indices = @transform_4, window_bounds = array<i64: 1, 8, 128>}, {transform_indices = @transform_5, window_bounds = array<i64: 1, 8, 128>}, {transform_indices = @transform_6, window_bounds = array<i64: 1, 8, 128>}]} {
    %c0_i32 = arith.constant 0 : i32
    %0 = arith.cmpi eq, %arg1, %c0_i32 : i32
    %1 = arith.extui %0 : i1 to i32
    %c0_i32_0 = arith.constant 0 : i32
    %2 = arith.cmpi ne, %1, %c0_i32_0 : i32
    scf.if %2 {
      %cst_40 = arith.constant -1.000000e+30 : f32
      %59 = vector.broadcast %cst_40 : f32 to vector<8x128xf32>
      %cst_41 = arith.constant 0.000000e+00 : f32
      %60 = vector.broadcast %cst_41 : f32 to vector<8x128xf32>
      %c0_42 = arith.constant 0 : index
      %c0_43 = arith.constant 0 : index
      %c0_44 = arith.constant 0 : index
      %61 = vector.load %arg4[%c0_42, %c0_43, %c0_44] : memref<1x8x128xf32, #tpu.memory_space<vmem>>, vector<1x8x128xf32>
      %62 = vector.shape_cast %61 : vector<1x8x128xf32> to vector<8x128xf32>
      %63 = vector.shape_cast %59 : vector<8x128xf32> to vector<1x8x128xf32>
      tpu.vector_store %arg4[%c0_42, %c0_43, %c0_44], %63 {strides = array<i32>} : memref<1x8x128xf32, #tpu.memory_space<vmem>>, vector<1x8x128xf32>,
      %c0_45 = arith.constant 0 : index
      %c0_46 = arith.constant 0 : index
      %c0_47 = arith.constant 0 : index
      %64 = vector.load %arg7[%c0_45, %c0_46, %c0_47] : memref<1x8x128xf32, #tpu.memory_space<vmem>>, vector<1x8x128xf32>
      %65 = vector.shape_cast %64 : vector<1x8x128xf32> to vector<8x128xf32>
      %66 = vector.shape_cast %59 : vector<8x128xf32> to vector<1x8x128xf32>
      tpu.vector_store %arg7[%c0_45, %c0_46, %c0_47], %66 {strides = array<i32>} : memref<1x8x128xf32, #tpu.memory_space<vmem>>, vector<1x8x128xf32>,
      %c0_48 = arith.constant 0 : index
      %c0_49 = arith.constant 0 : index
      %c0_50 = arith.constant 0 : index
      %67 = vector.load %arg5[%c0_48, %c0_49, %c0_50] : memref<1x8x128xf32, #tpu.memory_space<vmem>>, vector<1x8x128xf32>
      %68 = vector.shape_cast %67 : vector<1x8x128xf32> to vector<8x128xf32>
      %69 = vector.shape_cast %60 : vector<8x128xf32> to vector<1x8x128xf32>
      tpu.vector_store %arg5[%c0_48, %c0_49, %c0_50], %69 {strides = array<i32>} : memref<1x8x128xf32, #tpu.memory_space<vmem>>, vector<1x8x128xf32>,
      %c0_51 = arith.constant 0 : index
      %c0_52 = arith.constant 0 : index
      %c0_53 = arith.constant 0 : index
      %70 = vector.load %arg6[%c0_51, %c0_52, %c0_53] : memref<1x8x128xf32, #tpu.memory_space<vmem>>, vector<1x8x128xf32>
      %71 = vector.shape_cast %70 : vector<1x8x128xf32> to vector<8x128xf32>
      %72 = vector.shape_cast %60 : vector<8x128xf32> to vector<1x8x128xf32>
      tpu.vector_store %arg6[%c0_51, %c0_52, %c0_53], %72 {strides = array<i32>} : memref<1x8x128xf32, #tpu.memory_space<vmem>>, vector<1x8x128xf32>,
      %c0_54 = arith.constant 0 : index
      %c0_55 = arith.constant 0 : index
      %c0_56 = arith.constant 0 : index
      %73 = vector.load %arg8[%c0_54, %c0_55, %c0_56] : memref<1x8x128xf32, #tpu.memory_space<vmem>>, vector<1x8x128xf32>
      %74 = vector.shape_cast %73 : vector<1x8x128xf32> to vector<8x128xf32>
      %75 = vector.shape_cast %60 : vector<8x128xf32> to vector<1x8x128xf32>
      tpu.vector_store %arg8[%c0_54, %c0_55, %c0_56], %75 {strides = array<i32>} : memref<1x8x128xf32, #tpu.memory_space<vmem>>, vector<1x8x128xf32>,
    } else {
    }
    %c0 = arith.constant 0 : index
    %c0_1 = arith.constant 0 : index
    %c0_2 = arith.constant 0 : index
    %3 = vector.load %arg2[%c0, %c0_1, %c0_2] : memref<1x8x128xf32, #tpu.memory_space<vmem>>, vector<1x8x128xf32>
    %4 = vector.shape_cast %3 : vector<1x8x128xf32> to vector<8x128xf32>
    %c0_3 = arith.constant 0 : index
    %c0_4 = arith.constant 0 : index
    %c0_5 = arith.constant 0 : index
    %5 = vector.load %arg3[%c0_3, %c0_4, %c0_5] : memref<1x8x128xf32, #tpu.memory_space<vmem>>, vector<1x8x128xf32>
    %6 = vector.shape_cast %5 : vector<1x8x128xf32> to vector<8x128xf32>
    %7 = vector.shape_cast %4 : vector<8x128xf32> to vector<1x8x128xf32>
    %8 = vector.shape_cast %6 : vector<8x128xf32> to vector<1x8x128xf32>
    %c0_6 = arith.constant 0 : index
    %c0_7 = arith.constant 0 : index
    %c0_8 = arith.constant 0 : index
    %9 = vector.load %arg4[%c0_6, %c0_7, %c0_8] : memref<1x8x128xf32, #tpu.memory_space<vmem>>, vector<1x8x128xf32>
    %10 = vector.shape_cast %9 : vector<1x8x128xf32> to vector<8x128xf32>
    %cst = arith.constant dense<0xFF800000> : vector<8x128xf32>
    %11 = vector.multi_reduction <maximumf>, %7, %cst [0] : vector<1x8x128xf32> to vector<8x128xf32>
    %12 = arith.maximumf %10, %11 : vector<8x128xf32>
    %13 = arith.subf %10, %12 : vector<8x128xf32>
    %14 = math.exp %13 : vector<8x128xf32>
    %15 = vector.shape_cast %12 : vector<8x128xf32> to vector<1x8x128xf32>
    %16 = arith.subf %7, %15 : vector<1x8x128xf32>
    %17 = math.exp %16 : vector<1x8x128xf32>
    %c0_9 = arith.constant 0 : index
    %c0_10 = arith.constant 0 : index
    %c0_11 = arith.constant 0 : index
    %18 = vector.load %arg5[%c0_9, %c0_10, %c0_11] : memref<1x8x128xf32, #tpu.memory_space<vmem>>, vector<1x8x128xf32>
    %19 = vector.shape_cast %18 : vector<1x8x128xf32> to vector<8x128xf32>
    %20 = arith.mulf %14, %19 : vector<8x128xf32>
    %cst_12 = arith.constant dense<0.000000e+00> : vector<8x128xf32>
    %21 = vector.multi_reduction <add>, %17, %cst_12 [0] : vector<1x8x128xf32> to vector<8x128xf32>
    %22 = arith.addf %20, %21 : vector<8x128xf32>
    %c0_13 = arith.constant 0 : index
    %c0_14 = arith.constant 0 : index
    %c0_15 = arith.constant 0 : index
    %23 = vector.load %arg5[%c0_13, %c0_14, %c0_15] : memref<1x8x128xf32, #tpu.memory_space<vmem>>, vector<1x8x128xf32>
    %24 = vector.shape_cast %23 : vector<1x8x128xf32> to vector<8x128xf32>
    %25 = vector.shape_cast %22 : vector<8x128xf32> to vector<1x8x128xf32>
    tpu.vector_store %arg5[%c0_13, %c0_14, %c0_15], %25 {strides = array<i32>} : memref<1x8x128xf32, #tpu.memory_space<vmem>>, vector<1x8x128xf32>,
    %c0_16 = arith.constant 0 : index
    %c0_17 = arith.constant 0 : index
    %c0_18 = arith.constant 0 : index
    %26 = vector.load %arg6[%c0_16, %c0_17, %c0_18] : memref<1x8x128xf32, #tpu.memory_space<vmem>>, vector<1x8x128xf32>
    %27 = vector.shape_cast %26 : vector<1x8x128xf32> to vector<8x128xf32>
    %28 = arith.mulf %14, %27 : vector<8x128xf32>
    %29 = arith.subf %7, %8 : vector<1x8x128xf32>
    %30 = arith.mulf %17, %29 : vector<1x8x128xf32>
    %cst_19 = arith.constant dense<0.000000e+00> : vector<8x128xf32>
    %31 = vector.multi_reduction <add>, %30, %cst_19 [0] : vector<1x8x128xf32> to vector<8x128xf32>
    %32 = arith.addf %28, %31 : vector<8x128xf32>
    %c0_20 = arith.constant 0 : index
    %c0_21 = arith.constant 0 : index
    %c0_22 = arith.constant 0 : index
    %33 = vector.load %arg6[%c0_20, %c0_21, %c0_22] : memref<1x8x128xf32, #tpu.memory_space<vmem>>, vector<1x8x128xf32>
    %34 = vector.shape_cast %33 : vector<1x8x128xf32> to vector<8x128xf32>
    %35 = vector.shape_cast %32 : vector<8x128xf32> to vector<1x8x128xf32>
    tpu.vector_store %arg6[%c0_20, %c0_21, %c0_22], %35 {strides = array<i32>} : memref<1x8x128xf32, #tpu.memory_space<vmem>>, vector<1x8x128xf32>,
    %c0_23 = arith.constant 0 : index
    %c0_24 = arith.constant 0 : index
    %c0_25 = arith.constant 0 : index
    %36 = vector.load %arg4[%c0_23, %c0_24, %c0_25] : memref<1x8x128xf32, #tpu.memory_space<vmem>>, vector<1x8x128xf32>
    %37 = vector.shape_cast %36 : vector<1x8x128xf32> to vector<8x128xf32>
    %38 = vector.shape_cast %12 : vector<8x128xf32> to vector<1x8x128xf32>
    tpu.vector_store %arg4[%c0_23, %c0_24, %c0_25], %38 {strides = array<i32>} : memref<1x8x128xf32, #tpu.memory_space<vmem>>, vector<1x8x128xf32>,
    %c0_26 = arith.constant 0 : index
    %c0_27 = arith.constant 0 : index
    %c0_28 = arith.constant 0 : index
    %39 = vector.load %arg7[%c0_26, %c0_27, %c0_28] : memref<1x8x128xf32, #tpu.memory_space<vmem>>, vector<1x8x128xf32>
    %40 = vector.shape_cast %39 : vector<1x8x128xf32> to vector<8x128xf32>
    %cst_29 = arith.constant dense<0xFF800000> : vector<8x128xf32>
    %41 = vector.multi_reduction <maximumf>, %8, %cst_29 [0] : vector<1x8x128xf32> to vector<8x128xf32>
    %42 = arith.maximumf %40, %41 : vector<8x128xf32>
    %43 = arith.subf %40, %42 : vector<8x128xf32>
    %44 = math.exp %43 : vector<8x128xf32>
    %c0_30 = arith.constant 0 : index
    %c0_31 = arith.constant 0 : index
    %c0_32 = arith.constant 0 : index
    %45 = vector.load %arg8[%c0_30, %c0_31, %c0_32] : memref<1x8x128xf32, #tpu.memory_space<vmem>>, vector<1x8x128xf32>
    %46 = vector.shape_cast %45 : vector<1x8x128xf32> to vector<8x128xf32>
    %47 = arith.mulf %44, %46 : vector<8x128xf32>
    %48 = vector.shape_cast %42 : vector<8x128xf32> to vector<1x8x128xf32>
    %49 = arith.subf %8, %48 : vector<1x8x128xf32>
    %50 = math.exp %49 : vector<1x8x128xf32>
    %cst_33 = arith.constant dense<0.000000e+00> : vector<8x128xf32>
    %51 = vector.multi_reduction <add>, %50, %cst_33 [0] : vector<1x8x128xf32> to vector<8x128xf32>
    %52 = arith.addf %47, %51 : vector<8x128xf32>
    %c0_34 = arith.constant 0 : index
    %c0_35 = arith.constant 0 : index
    %c0_36 = arith.constant 0 : index
    %53 = vector.load %arg8[%c0_34, %c0_35, %c0_36] : memref<1x8x128xf32, #tpu.memory_space<vmem>>, vector<1x8x128xf32>
    %54 = vector.shape_cast %53 : vector<1x8x128xf32> to vector<8x128xf32>
    %55 = vector.shape_cast %52 : vector<8x128xf32> to vector<1x8x128xf32>
    tpu.vector_store %arg8[%c0_34, %c0_35, %c0_36], %55 {strides = array<i32>} : memref<1x8x128xf32, #tpu.memory_space<vmem>>, vector<1x8x128xf32>,
    %c0_37 = arith.constant 0 : index
    %c0_38 = arith.constant 0 : index
    %c0_39 = arith.constant 0 : index
    %56 = vector.load %arg7[%c0_37, %c0_38, %c0_39] : memref<1x8x128xf32, #tpu.memory_space<vmem>>, vector<1x8x128xf32>
    %57 = vector.shape_cast %56 : vector<1x8x128xf32> to vector<8x128xf32>
    %58 = vector.shape_cast %42 : vector<8x128xf32> to vector<1x8x128xf32>
    tpu.vector_store %arg7[%c0_37, %c0_38, %c0_39], %58 {strides = array<i32>} : memref<1x8x128xf32, #tpu.memory_space<vmem>>, vector<1x8x128xf32>,
    return
  }
  func.func @transform_0(%arg0: i32, %arg1: i32) -> (i32, i32, i32) {
    %c0_i32 = arith.constant 0 : i32
    %c0_i32_0 = arith.constant 0 : i32
    return %arg0, %arg1, %c0_i32 : i32, i32, i32
  }
  func.func @transform_1(%arg0: i32, %arg1: i32) -> (i32, i32, i32) {
    %c0_i32 = arith.constant 0 : i32
    %c0_i32_0 = arith.constant 0 : i32
    return %arg0, %arg1, %c0_i32 : i32, i32, i32
  }
  func.func @transform_2(%arg0: i32, %arg1: i32) -> (i32, i32, i32) {
    %c0_i32 = arith.constant 0 : i32
    %c0_i32_0 = arith.constant 0 : i32
    %c0_i32_1 = arith.constant 0 : i32
    return %arg0, %c0_i32, %c0_i32_0 : i32, i32, i32
  }
  func.func @transform_3(%arg0: i32, %arg1: i32) -> (i32, i32, i32) {
    %c0_i32 = arith.constant 0 : i32
    %c0_i32_0 = arith.constant 0 : i32
    %c0_i32_1 = arith.constant 0 : i32
    return %arg0, %c0_i32, %c0_i32_0 : i32, i32, i32
  }
  func.func @transform_4(%arg0: i32, %arg1: i32) -> (i32, i32, i32) {
    %c0_i32 = arith.constant 0 : i32
    %c0_i32_0 = arith.constant 0 : i32
    %c0_i32_1 = arith.constant 0 : i32
    return %arg0, %c0_i32, %c0_i32_0 : i32, i32, i32
  }
  func.func @transform_5(%arg0: i32, %arg1: i32) -> (i32, i32, i32) {
    %c0_i32 = arith.constant 0 : i32
    %c0_i32_0 = arith.constant 0 : i32
    %c0_i32_1 = arith.constant 0 : i32
    return %arg0, %c0_i32, %c0_i32_0 : i32, i32, i32
  }
  func.func @transform_6(%arg0: i32, %arg1: i32) -> (i32, i32, i32) {
    %c0_i32 = arith.constant 0 : i32
    %c0_i32_0 = arith.constant 0 : i32
    %c0_i32_1 = arith.constant 0 : i32
    return %arg0, %c0_i32, %c0_i32_0 : i32, i32, i32
  }
}

</mosaic_0001>

<llo_original>
// kernel: criterion_kl2.1
$region0: #{criterion_kl2.1}
  #allocation0 [shape = 'u32[]', space=smem, size = 0x4, offset = 0x4, fixed_abs, tag = 'smem constant byte address 0x4 - core index']
  #allocation1 [shape = 'u32[144,128]{1,0:T(1,128)}', space=vmem, size = 0x12000, scoped, tag = 'internal scratch']
  %s0 = inlined_call_operand.vmem [shape: f32[2,8,128], index: 0, kind: input, shape index: {}]
  %s1 = inlined_call_operand.vmem [shape: f32[2,8,128], index: 1, kind: input, shape index: {}]
  %s2 = inlined_call_operand.vmem [shape: f32[2,8,128], index: 2, kind: output, shape index: {0}]
  %s3 = inlined_call_operand.vmem [shape: f32[2,8,128], index: 3, kind: output, shape index: {1}]
  %s4 = inlined_call_operand.vmem [shape: f32[2,8,128], index: 4, kind: output, shape index: {2}]
  %s5 = inlined_call_operand.vmem [shape: f32[2,8,128], index: 5, kind: output, shape index: {3}]
  %s6 = inlined_call_operand.vmem [shape: f32[2,8,128], index: 6, kind: output, shape index: {4}]
  %7 = xla_tuple %s2, %s3, %s4, %s5, %s6
  %s8 = sld [smem:[#allocation0]]
  $region77: #{criterion_kl2.1} parent=0
    _
  %s10 = ssub.s32 1, %s8
  %s11 = scalar_select 0, %s10, %s8
  loop: start=0, step=1, limit=4
  $region2: #{criterion_kl2.1} parent=0 // loop_pre_header
    _
  $region3: #{criterion_kl2.1} parent=0 // loop_header
    %s13 = sphi 0, %s17
    %p14 = scmp.ge.s32.totalorder %s13, 4
    %s20 = sphi 0, %s32
    %s21 = sphi 0, %s28
    %s22 = sphi 0, %s20
    %s23 = sphi 0, %s21
    %s24 = sphi 0, %s22
    %s25 = sphi 0, %s23
    %s37 = sphi 0, %s39
    %s40 = sphi 0, %s37
    %s41 = sphi 0, %s40
    %s57 = sphi 0, %s41
    %s65 = sphi 0, %s67
    %s68 = sphi 0, %s65
    %s69 = sphi 0, %s68
    %s85 = sphi 0, %s69
    %s91 = sphi 0, %s93
    %s94 = sphi 0, %s91
    %s95 = sphi 0, %s94
    %s111 = sphi 0, %s95
    %s117 = sphi 0, %s119
    %s120 = sphi 0, %s117
    %s121 = sphi 0, %s120
    %s137 = sphi 0, %s121
    %s143 = sphi 0, %s145
    %s146 = sphi 0, %s143
    %s147 = sphi 0, %s146
    %s163 = sphi 0, %s147
    %s169 = sphi 0, %s171
    %s172 = sphi 0, %s169
    %s173 = sphi 0, %s172
    %s189 = sphi 0, %s173
    %s195 = sphi 0, %s197
    %s198 = sphi 0, %s195
    %s199 = sphi 0, %s198
    %s215 = sphi 0, %s199
  $region4: #{criterion_kl2.1} parent=0 // loop_header_branch
    %16 = sbr.rel (%p14) target = $region8
  $region5: #{criterion_kl2.1} parent=0 // loop_body
    %s18 = ssub.s32 %s13, 1
    %s19 = ssub.s32 %s13, 2
    %s26 = sadd.s32 1, %s21
    %p27 = scmp.ge.s32.totalorder %s26, 1
    %s28 = scalar_select %p27, 0, %s26
    %s29 = sadd.s32 1, %s20
    %s30 = scalar_select %p27, %s29, %s20
    %p31 = scmp.ge.s32.totalorder %s30, 2
    %s32 = scalar_select %p31, 0, %s30
    %s33 = ssub.s32 %s20, %s32
    %s34 = ssub.s32 %s21, %s28
    %s35 = sor.u32 %s33, %s34
    %p36 = scmp.eq.s32.totalorder %s35, 0
    %s38 = sadd.s32 %s37, 1
    %s39 = scalar_select %p36, %s37, %s38
    %p42 = pneg %p36
    %p43 = scmp.eq.s32.totalorder %s13, 1
    %p44 = por %p42, %p43
    %p45 = scmp.ne.s32.totalorder %s37, %s40
    %p46 = scmp.eq.s32.totalorder %s13, 0
    %p47 = por %p45, %p46
    %p48 = scmp.ne.s32.totalorder %s37, %s40
    %p49 = scmp.eq.s32.totalorder %s18, 1
    %p50 = por %p48, %p49
    %p51 = scmp.ne.s32.totalorder %s40, %s41
    %p52 = scmp.eq.s32.totalorder %s18, 0
    %p53 = por %p51, %p52
    %p54 = scmp.ne.s32.totalorder %s40, %s41
    %p55 = scmp.eq.s32.totalorder %s19, 1
    %p56 = por %p54, %p55
    %p58 = scmp.ne.s32.totalorder %s41, %s57
    %p59 = scmp.eq.s32.totalorder %s19, 0
    %p60 = por %p58, %p59
    %s61 = ssub.s32 %s20, %s32
    %s62 = ssub.s32 %s21, %s28
    %s63 = sor.u32 %s61, %s62
    %p64 = scmp.eq.s32.totalorder %s63, 0
    %s66 = sadd.s32 %s65, 1
    %s67 = scalar_select %p64, %s65, %s66
    %p70 = pneg %p64
    %p71 = scmp.eq.s32.totalorder %s13, 1
    %p72 = por %p70, %p71
    %p73 = scmp.ne.s32.totalorder %s65, %s68
    %p74 = scmp.eq.s32.totalorder %s13, 0
    %p75 = por %p73, %p74
    %p76 = scmp.ne.s32.totalorder %s65, %s68
    %p77 = scmp.eq.s32.totalorder %s18, 1
    %p78 = por %p76, %p77
    %p79 = scmp.ne.s32.totalorder %s68, %s69
    %p80 = scmp.eq.s32.totalorder %s18, 0
    %p81 = por %p79, %p80
    %p82 = scmp.ne.s32.totalorder %s68, %s69
    %p83 = scmp.eq.s32.totalorder %s19, 1
    %p84 = por %p82, %p83
    %p86 = scmp.ne.s32.totalorder %s69, %s85
    %p87 = scmp.eq.s32.totalorder %s19, 0
    %p88 = por %p86, %p87
    %s89 = ssub.s32 %s20, %s32
    %p90 = scmp.eq.s32.totalorder %s89, 0
    %s92 = sadd.s32 %s91, 1
    %s93 = scalar_select %p90, %s91, %s92
    %p96 = pneg %p90
    %p97 = scmp.eq.s32.totalorder %s13, 1
    %p98 = por %p96, %p97
    %p99 = scmp.ne.s32.totalorder %s91, %s94
    %p100 = scmp.eq.s32.totalorder %s13, 0
    %p101 = por %p99, %p100
    %p102 = scmp.ne.s32.totalorder %s91, %s94
    %p103 = scmp.eq.s32.totalorder %s18, 1
    %p104 = por %p102, %p103
    %p105 = scmp.ne.s32.totalorder %s94, %s95
    %p106 = scmp.eq.s32.totalorder %s18, 0
    %p107 = por %p105, %p106
    %p108 = scmp.ne.s32.totalorder %s94, %s95
    %p109 = scmp.eq.s32.totalorder %s19, 1
    %p110 = por %p108, %p109
    %p112 = scmp.ne.s32.totalorder %s95, %s111
    %p113 = scmp.eq.s32.totalorder %s19, 0
    %p114 = por %p112, %p113
    %s115 = ssub.s32 %s20, %s32
    %p116 = scmp.eq.s32.totalorder %s115, 0
    %s118 = sadd.s32 %s117, 1
    %s119 = scalar_select %p116, %s117, %s118
    %p122 = pneg %p116
    %p123 = scmp.eq.s32.totalorder %s13, 1
    %p124 = por %p122, %p123
    %p125 = scmp.ne.s32.totalorder %s117, %s120
    %p126 = scmp.eq.s32.totalorder %s13, 0
    %p127 = por %p125, %p126
    %p128 = scmp.ne.s32.totalorder %s117, %s120
    %p129 = scmp.eq.s32.totalorder %s18, 1
    %p130 = por %p128, %p129
    %p131 = scmp.ne.s32.totalorder %s120, %s121
    %p132 = scmp.eq.s32.totalorder %s18, 0
    %p133 = por %p131, %p132
    %p134 = scmp.ne.s32.totalorder %s120, %s121
    %p135 = scmp.eq.s32.totalorder %s19, 1
    %p136 = por %p134, %p135
    %p138 = scmp.ne.s32.totalorder %s121, %s137
    %p139 = scmp.eq.s32.totalorder %s19, 0
    %p140 = por %p138, %p139
    %s141 = ssub.s32 %s20, %s32
    %p142 = scmp.eq.s32.totalorder %s141, 0
    %s144 = sadd.s32 %s143, 1
    %s145 = scalar_select %p142, %s143, %s144
    %p148 = pneg %p142
    %p149 = scmp.eq.s32.totalorder %s13, 1
    %p150 = por %p148, %p149
    %p151 = scmp.ne.s32.totalorder %s143, %s146
    %p152 = scmp.eq.s32.totalorder %s13, 0
    %p153 = por %p151, %p152
    %p154 = scmp.ne.s32.totalorder %s143, %s146
    %p155 = scmp.eq.s32.totalorder %s18, 1
    %p156 = por %p154, %p155
    %p157 = scmp.ne.s32.totalorder %s146, %s147
    %p158 = scmp.eq.s32.totalorder %s18, 0
    %p159 = por %p157, %p158
    %p160 = scmp.ne.s32.totalorder %s146, %s147
    %p161 = scmp.eq.s32.totalorder %s19, 1
    %p162 = por %p160, %p161
    %p164 = scmp.ne.s32.totalorder %s147, %s163
    %p165 = scmp.eq.s32.totalorder %s19, 0
    %p166 = por %p164, %p165
    %s167 = ssub.s32 %s20, %s32
    %p168 = scmp.eq.s32.totalorder %s167, 0
    %s170 = sadd.s32 %s169, 1
    %s171 = scalar_select %p168, %s169, %s170
    %p174 = pneg %p168
    %p175 = scmp.eq.s32.totalorder %s13, 1
    %p176 = por %p174, %p175
    %p177 = scmp.ne.s32.totalorder %s169, %s172
    %p178 = scmp.eq.s32.totalorder %s13, 0
    %p179 = por %p177, %p178
    %p180 = scmp.ne.s32.totalorder %s169, %s172
    %p181 = scmp.eq.s32.totalorder %s18, 1
    %p182 = por %p180, %p181
    %p183 = scmp.ne.s32.totalorder %s172, %s173
    %p184 = scmp.eq.s32.totalorder %s18, 0
    %p185 = por %p183, %p184
    %p186 = scmp.ne.s32.totalorder %s172, %s173
    %p187 = scmp.eq.s32.totalorder %s19, 1
    %p188 = por %p186, %p187
    %p190 = scmp.ne.s32.totalorder %s173, %s189
    %p191 = scmp.eq.s32.totalorder %s19, 0
    %p192 = por %p190, %p191
    %s193 = ssub.s32 %s20, %s32
    %p194 = scmp.eq.s32.totalorder %s193, 0
    %s196 = sadd.s32 %s195, 1
    %s197 = scalar_select %p194, %s195, %s196
    %p200 = pneg %p194
    %p201 = scmp.eq.s32.totalorder %s13, 1
    %p202 = por %p200, %p201
    %p203 = scmp.ne.s32.totalorder %s195, %s198
    %p204 = scmp.eq.s32.totalorder %s13, 0
    %p205 = por %p203, %p204
    %p206 = scmp.ne.s32.totalorder %s195, %s198
    %p207 = scmp.eq.s32.totalorder %s18, 1
    %p208 = por %p206, %p207
    %p209 = scmp.ne.s32.totalorder %s198, %s199
    %p210 = scmp.eq.s32.totalorder %s18, 0
    %p211 = por %p209, %p210
    %p212 = scmp.ne.s32.totalorder %s198, %s199
    %p213 = scmp.eq.s32.totalorder %s19, 1
    %p214 = por %p212, %p213
    %p216 = scmp.ne.s32.totalorder %s199, %s215
    %p217 = scmp.eq.s32.totalorder %s19, 0
    %p218 = por %p216, %p217
    %p219 = scmp.le.s32.totalorder 1, %s13
    %p220 = scmp.lt.s32.totalorder %s13, 3
    %p221 = pnand %p219, %p220
    %p222 = pneg %p221
    // Predicated region
    $region9: #{criterion_kl2.1} parent=5 // pred_check
      _
    $region10: #{criterion_kl2.1} parent=5 // pred_check_branch
      %224 = sbr.rel (%p221) target = $region12
    $region11: #{criterion_kl2.1} parent=5 // pred_region
      %s225 = ssub.s32 %s13, 1
    $region12: #{criterion_kl2.1} parent=5 // pred_fallthru
      _
    %p226 = scmp.lt.s32.totalorder %s13, 2
    // Predicated region
    $region13: #{criterion_kl2.1} parent=5 // pred_check
      %p227 = pneg %p226
    $region14: #{criterion_kl2.1} parent=5 // pred_check_branch
      %229 = sbr.rel (%p227) target = $region16
    $region15: #{criterion_kl2.1} parent=5 // pred_region
      // Predicated region
      $region17: #{criterion_kl2.1} parent=15 // pred_check
        %p230 = pneg %p47
      $region18: #{criterion_kl2.1} parent=15 // pred_check_branch
        %232 = sbr.rel (%p230) target = $region20
      $region19: #{criterion_kl2.1} parent=15 // pred_region
        %p233 = scmp.lt.s32.totalorder %s20, 1
        %s234 = scalar_select %p233, %s20, 1
        %p235 = scmp.lt.s32.totalorder %s21, 0
        %s236 = scalar_select %p235, %s21, 0
        %s237 = sadd.s32 %s236, %s234
        %s238 = smul.addr %s237, 8
        %s239 = scalar_lea.vmem %s0, %s238
      $region20: #{criterion_kl2.1} parent=15 // pred_fallthru
        _
      // Predicated region
      $region21: #{criterion_kl2.1} parent=15 // pred_check
        %p240 = pneg %p75
      $region22: #{criterion_kl2.1} parent=15 // pred_check_branch
        %242 = sbr.rel (%p240) target = $region24
      $region23: #{criterion_kl2.1} parent=15 // pred_region
        %p243 = scmp.lt.s32.totalorder %s20, 1
        %s244 = scalar_select %p243, %s20, 1
        %p245 = scmp.lt.s32.totalorder %s21, 0
        %s246 = scalar_select %p245, %s21, 0
        %s247 = sadd.s32 %s246, %s244
        %s248 = smul.addr %s247, 8
        %s249 = scalar_lea.vmem %s1, %s248
      $region24: #{criterion_kl2.1} parent=15 // pred_fallthru
        _
    $region16: #{criterion_kl2.1} parent=5 // pred_fallthru
      _
    %p250 = scmp.le.s32.totalorder 1, %s13
    %p251 = scmp.lt.s32.totalorder %s13, 3
    %p252 = pnand %p250, %p251
    %p253 = pneg %p252
    // Predicated region
    $region25: #{criterion_kl2.1} parent=5 // pred_check
      _
    $region26: #{criterion_kl2.1} parent=5 // pred_check_branch
      %255 = sbr.rel (%p252) target = $region28
    $region27: #{criterion_kl2.1} parent=5 // pred_region
      %s256 = ssub.s32 %s13, 1
      %p257 = scmp.lt.s32.totalorder %s22, 1
      %s258 = scalar_select %p257, %s22, 1
      %p259 = scmp.lt.s32.totalorder %s23, 0
      %s260 = scalar_select %p259, %s23, 0
      %s261 = sadd.s32 %s260, %s258
      %s262 = smul.addr %s261, 8
      %s263 = scalar_lea.vmem %s0, %s262
      %p264 = pneg %p53
      %p265 = pneg %p50
      %p266 = scmp.lt.s32.totalorder %s22, 1
      %s267 = scalar_select %p266, %s22, 1
      %p268 = scmp.lt.s32.totalorder %s23, 0
      %s269 = scalar_select %p268, %s23, 0
      %s270 = sadd.s32 %s269, %s267
      %s271 = smul.addr %s270, 8
      %s272 = scalar_lea.vmem %s1, %s271
      %p273 = pneg %p81
      %p274 = pneg %p78
      %p275 = pneg %p107
      %p276 = pneg %p104
      %p277 = scmp.lt.s32.totalorder %s22, 1
      %s278 = scalar_select %p277, %s22, 1
      %s279 = smul.addr %s278, 8
      %s280 = scalar_lea.vmem %s2, %s279
      %p281 = pneg %p133
      %p282 = pneg %p130
      %p283 = scmp.lt.s32.totalorder %s22, 1
      %s284 = scalar_select %p283, %s22, 1
      %s285 = smul.addr %s284, 8
      %s286 = scalar_lea.vmem %s3, %s285
      %p287 = pneg %p159
      %p288 = pneg %p156
      %p289 = scmp.lt.s32.totalorder %s22, 1
      %s290 = scalar_select %p289, %s22, 1
      %s291 = smul.addr %s290, 8
      %s292 = scalar_lea.vmem %s4, %s291
      %p293 = pneg %p185
      %p294 = pneg %p182
      %p295 = scmp.lt.s32.totalorder %s22, 1
      %s296 = scalar_select %p295, %s22, 1
      %s297 = smul.addr %s296, 8
      %s298 = scalar_lea.vmem %s5, %s297
      %p299 = pneg %p211
      %p300 = pneg %p208
      %p301 = scmp.lt.s32.totalorder %s22, 1
      %s302 = scalar_select %p301, %s22, 1
      %s303 = smul.addr %s302, 8
      %s304 = scalar_lea.vmem %s6, %s303
      %p305 = scmp.lt.s32.totalorder %s22, 1
      %s306 = scalar_select %p305, %s22, 1
      %p307 = scmp.lt.s32.totalorder %s23, 0
      %s308 = scalar_select %p307, %s23, 0
      %s309 = sadd.s32 %s308, %s306
      %s310 = smul.addr %s309, 8
      %s311 = scalar_lea.vmem %s0, %s310
      %p312 = scmp.lt.s32.totalorder %s22, 1
      %s313 = scalar_select %p312, %s22, 1
      %p314 = scmp.lt.s32.totalorder %s23, 0
      %s315 = scalar_select %p314, %s23, 0
      %s316 = sadd.s32 %s315, %s313
      %s317 = smul.addr %s316, 8
      %s318 = scalar_lea.vmem %s1, %s317
      %p319 = scmp.lt.s32.totalorder %s22, 1
      %s320 = scalar_select %p319, %s22, 1
      %s321 = smul.addr %s320, 8
      %s322 = scalar_lea.vmem %s2, %s321
      %p323 = scmp.lt.s32.totalorder %s22, 1
      %s324 = scalar_select %p323, %s22, 1
      %s325 = smul.addr %s324, 8
      %s326 = scalar_lea.vmem %s3, %s325
      %p327 = scmp.lt.s32.totalorder %s22, 1
      %s328 = scalar_select %p327, %s22, 1
      %s329 = smul.addr %s328, 8
      %s330 = scalar_lea.vmem %s4, %s329
      %p331 = scmp.lt.s32.totalorder %s22, 1
      %s332 = scalar_select %p331, %s22, 1
      %s333 = smul.addr %s332, 8
      %s334 = scalar_lea.vmem %s5, %s333
      %p335 = scmp.lt.s32.totalorder %s22, 1
      %s336 = scalar_select %p335, %s22, 1
      %s337 = smul.addr %s336, 8
      %s338 = scalar_lea.vmem %s6, %s337
      %p339 = scmp.eq.s32.totalorder %s23, 0
      // Predicated region
      $region29: #{criterion_kl2.1} parent=27 // pred_check
        %p340 = pneg %p339
      $region30: #{criterion_kl2.1} parent=27 // pred_check_branch
        %342 = sbr.rel (%p340) target = $region32
      $region31: #{criterion_kl2.1} parent=27 // pred_region
        %343 = vst [vmem:[%s322] sm:$0xff] -1e+30
        %344 = vst [vmem:[%s334] sm:$0xff] -1e+30
        %345 = vst [vmem:[%s326] sm:$0xff] 0.0
        %346 = vst [vmem:[%s330] sm:$0xff] 0.0
        %347 = vst [vmem:[%s338] sm:$0xff] 0.0
      $region32: #{criterion_kl2.1} parent=27 // pred_fallthru
        _
      %v348 = vld [vmem:[%s311] sm:$0xff]
      %v349 = vld [vmem:[%s318] sm:$0xff]
      %v350 = vld [vmem:[%s322] sm:$0xff]
      %v351 = vmax.f32 %v350, %v348
      %v352 = vsub.f32 %v350, %v351
      %v353 = vmul.f32 %v352, 1.442695
      %v354 = vpow.pop %v353
      %v355 = vsub.f32 %v348, %v351
      %v356 = vmul.f32 %v355, 1.442695
      %v357 = vpow.pop %v356
      %v358 = vld [vmem:[%s326] sm:$0xff]
      %v359 = vmul.f32 %v354, %v358
      %v360 = vadd.f32 %v357, 0.0
      %v361 = vadd.f32 %v359, %v360
      %362 = vst [vmem:[%s326] sm:$0xff] %v361
      %v363 = vld [vmem:[%s330] sm:$0xff]
      %v364 = vmul.f32 %v354, %v363
      %v365 = vsub.f32 %v348, %v349
      %v366 = vmul.f32 %v357, %v365
      %v367 = vadd.f32 %v366, 0.0
      %v368 = vadd.f32 %v364, %v367
      %369 = vst [vmem:[%s330] sm:$0xff] %v368
      %370 = vst [vmem:[%s322] sm:$0xff] %v351
      %v371 = vld [vmem:[%s334] sm:$0xff]
      %v372 = vmax.f32 %v371, %v349
      %v373 = vsub.f32 %v371, %v372
      %v374 = vmul.f32 %v373, 1.442695
      %v375 = vpow.pop %v374
      %v376 = vld [vmem:[%s338] sm:$0xff]
      %v377 = vmul.f32 %v375, %v376
      %v378 = vsub.f32 %v349, %v372
      %v379 = vmul.f32 %v378, 1.442695
      %v380 = vpow.pop %v379
      %v381 = vadd.f32 %v380, 0.0
      %v382 = vadd.f32 %v377, %v381
      %383 = vst [vmem:[%s338] sm:$0xff] %v382
      %384 = vst [vmem:[%s334] sm:$0xff] %v372
      %p385 = scmp.lt.s32.totalorder %s22, 1
      %s386 = scalar_select %p385, %s22, 1
      %s387 = smul.addr %s386, 8
      %s388 = scalar_lea.vmem %s2, %s387
      %p389 = scmp.lt.s32.totalorder %s22, 1
      %s390 = scalar_select %p389, %s22, 1
      %s391 = smul.addr %s390, 8
      %s392 = scalar_lea.vmem %s3, %s391
      %p393 = scmp.lt.s32.totalorder %s22, 1
      %s394 = scalar_select %p393, %s22, 1
      %s395 = smul.addr %s394, 8
      %s396 = scalar_lea.vmem %s4, %s395
      %p397 = scmp.lt.s32.totalorder %s22, 1
      %s398 = scalar_select %p397, %s22, 1
      %s399 = smul.addr %s398, 8
      %s400 = scalar_lea.vmem %s5, %s399
      %p401 = scmp.lt.s32.totalorder %s22, 1
      %s402 = scalar_select %p401, %s22, 1
      %s403 = smul.addr %s402, 8
      %s404 = scalar_lea.vmem %s6, %s403
      // Predicated region
      $region33: #{criterion_kl2.1} parent=27 // pred_check
        %p405 = pneg %p104
      $region34: #{criterion_kl2.1} parent=27 // pred_check_branch
        %407 = sbr.rel (%p405) target = $region36
      $region35: #{criterion_kl2.1} parent=27 // pred_region
        _
      $region36: #{criterion_kl2.1} parent=27 // pred_fallthru
        _
      // Predicated region
      $region37: #{criterion_kl2.1} parent=27 // pred_check
        %p408 = pneg %p130
      $region38: #{criterion_kl2.1} parent=27 // pred_check_branch
        %410 = sbr.rel (%p408) target = $region40
      $region39: #{criterion_kl2.1} parent=27 // pred_region
        _
      $region40: #{criterion_kl2.1} parent=27 // pred_fallthru
        _
      // Predicated region
      $region41: #{criterion_kl2.1} parent=27 // pred_check
        %p411 = pneg %p156
      $region42: #{criterion_kl2.1} parent=27 // pred_check_branch
        %413 = sbr.rel (%p411) target = $region44
      $region43: #{criterion_kl2.1} parent=27 // pred_region
        _
      $region44: #{criterion_kl2.1} parent=27 // pred_fallthru
        _
      // Predicated region
      $region45: #{criterion_kl2.1} parent=27 // pred_check
        %p414 = pneg %p182
      $region46: #{criterion_kl2.1} parent=27 // pred_check_branch
        %416 = sbr.rel (%p414) target = $region48
      $region47: #{criterion_kl2.1} parent=27 // pred_region
        _
      $region48: #{criterion_kl2.1} parent=27 // pred_fallthru
        _
      // Predicated region
      $region49: #{criterion_kl2.1} parent=27 // pred_check
        %p417 = pneg %p208
      $region50: #{criterion_kl2.1} parent=27 // pred_check_branch
        %419 = sbr.rel (%p417) target = $region52
      $region51: #{criterion_kl2.1} parent=27 // pred_region
        _
      $region52: #{criterion_kl2.1} parent=27 // pred_fallthru
        _
    $region28: #{criterion_kl2.1} parent=5 // pred_fallthru
      _
    %p420 = scmp.le.s32.totalorder 2, %s13
    // Predicated region
    $region53: #{criterion_kl2.1} parent=5 // pred_check
      %p421 = pneg %p420
    $region54: #{criterion_kl2.1} parent=5 // pred_check_branch
      %423 = sbr.rel (%p421) target = $region56
    $region55: #{criterion_kl2.1} parent=5 // pred_region
      %s424 = ssub.s32 %s13, 2
      // Predicated region
      $region57: #{criterion_kl2.1} parent=55 // pred_check
        %p425 = pneg %p110
      $region58: #{criterion_kl2.1} parent=55 // pred_check_branch
        %427 = sbr.rel (%p425) target = $region60
      $region59: #{criterion_kl2.1} parent=55 // pred_region
        %p428 = scmp.lt.s32.totalorder %s24, 1
        %s429 = scalar_select %p428, %s24, 1
        %s430 = smul.addr %s429, 8
        %s431 = scalar_lea.vmem %s2, %s430
      $region60: #{criterion_kl2.1} parent=55 // pred_fallthru
        _
      // Predicated region
      $region61: #{criterion_kl2.1} parent=55 // pred_check
        %p432 = pneg %p136
      $region62: #{criterion_kl2.1} parent=55 // pred_check_branch
        %434 = sbr.rel (%p432) target = $region64
      $region63: #{criterion_kl2.1} parent=55 // pred_region
        %p435 = scmp.lt.s32.totalorder %s24, 1
        %s436 = scalar_select %p435, %s24, 1
        %s437 = smul.addr %s436, 8
        %s438 = scalar_lea.vmem %s3, %s437
      $region64: #{criterion_kl2.1} parent=55 // pred_fallthru
        _
      // Predicated region
      $region65: #{criterion_kl2.1} parent=55 // pred_check
        %p439 = pneg %p162
      $region66: #{criterion_kl2.1} parent=55 // pred_check_branch
        %441 = sbr.rel (%p439) target = $region68
      $region67: #{criterion_kl2.1} parent=55 // pred_region
        %p442 = scmp.lt.s32.totalorder %s24, 1
        %s443 = scalar_select %p442, %s24, 1
        %s444 = smul.addr %s443, 8
        %s445 = scalar_lea.vmem %s4, %s444
      $region68: #{criterion_kl2.1} parent=55 // pred_fallthru
        _
      // Predicated region
      $region69: #{criterion_kl2.1} parent=55 // pred_check
        %p446 = pneg %p188
      $region70: #{criterion_kl2.1} parent=55 // pred_check_branch
        %448 = sbr.rel (%p446) target = $region72
      $region71: #{criterion_kl2.1} parent=55 // pred_region
        %p449 = scmp.lt.s32.totalorder %s24, 1
        %s450 = scalar_select %p449, %s24, 1
        %s451 = smul.addr %s450, 8
        %s452 = scalar_lea.vmem %s5, %s451
      $region72: #{criterion_kl2.1} parent=55 // pred_fallthru
        _
      // Predicated region
      $region73: #{criterion_kl2.1} parent=55 // pred_check
        %p453 = pneg %p214
      $region74: #{criterion_kl2.1} parent=55 // pred_check_branch
        %455 = sbr.rel (%p453) target = $region76
      $region75: #{criterion_kl2.1} parent=55 // pred_region
        %p456 = scmp.lt.s32.totalorder %s24, 1
        %s457 = scalar_select %p456, %s24, 1
        %s458 = smul.addr %s457, 8
        %s459 = scalar_lea.vmem %s6, %s458
      $region76: #{criterion_kl2.1} parent=55 // pred_fallthru
        _
    $region56: #{criterion_kl2.1} parent=5 // pred_fallthru
      _
  $region6: #{criterion_kl2.1} parent=0 // loop_footer
    %s17 = sadd.s32 1, %s13
  $region7: #{criterion_kl2.1} parent=0 // loop_footer_branch
    %12 = sbr.rel target = $region3
  $region8: #{criterion_kl2.1} parent=0 // loop_exit
    _

</llo_original>
